<compile_context>
chip_gen: v7x
topology: tpu7x:2x2x1
jax: 0.10.0
libtpu: 0.0.40
codegen_flags: <defaults>
</compile_context>

<pallas_src>
import math

import jax
import jax.numpy as jnp
from jax.experimental import pallas as pl
from jax.experimental.pallas import tpu as pltpu

sigma_max = 50.0
sigma_min = 0.01

_LOG_SIGMA_MIN = math.log(sigma_min)
_LOG_RATIO = math.log(sigma_max / sigma_min)

_OUT_LANES = 8  # head padded to 8 lanes (2 real + 6 zero) -> narrow HBM store


def _round_up(n, m):
    return ((n + m - 1) // m) * m


def _default_compute_dtype():
    """bf16 elementwise chain on chips with bf16 VPU/EUP (v6e/v7x); f32 otherwise."""
    try:
        kind = jax.devices()[0].device_kind.lower()
    except Exception:
        return jnp.float32
    if ("v6" in kind) or ("v7" in kind) or ("tpu7" in kind):
        return jnp.bfloat16
    return jnp.float32


def _make_kernel(compute_dtype):
    def scorenet_kernel(xt_ref, w1_ref, b1_ref, w2_ref, b2_ref,
                        w3_ref, b3_ref, w4_ref, b4_ref, out_ref):
        def silu(h):
            # silu(h) = h * sigmoid(h) = h * (0.5 + 0.5*tanh(0.5*h)):
            # a single EUP transcendental per element.
            return h * (0.5 * jnp.tanh(0.5 * h) + 0.5)

        xt = xt_ref[...]                                    # [TB, 4] f32: x0, x1, t, 0
        t_proj = _LOG_SIGMA_MIN + xt[:, 2:3] * _LOG_RATIO   # [TB, 1] f32

        # Layer 1 (in=3): broadcast multiply-adds on the VPU instead of an
        # underfilled K=3 MXU contraction.
        w1 = w1_ref[...]                                    # [3, 128] f32
        h = (xt[:, 0:1] * w1[0:1, :]
             + xt[:, 1:2] * w1[1:2, :]
             + t_proj * w1[2:3, :]
             + b1_ref[...])                                 # [TB, 128] f32
        h = silu(h.astype(compute_dtype))

        # Layers 2/3: bf16 MXU operands, f32 accumulate + bias, SiLU in
        # compute_dtype (bf16 on v6e/v7x, f32 on v5e).
        h = jnp.dot(h.astype(jnp.bfloat16), w2_ref[...],
                    preferred_element_type=jnp.float32) + b2_ref[...]   # [TB, 256]
        h = silu(h.astype(compute_dtype))
        h = jnp.dot(h.astype(jnp.bfloat16), w3_ref[...],
                    preferred_element_type=jnp.float32) + b3_ref[...]   # [TB, 128]
        h = silu(h.astype(compute_dtype))

        # Head: weight zero-padded to [128, 8] -> narrow (TB, 8) output block,
        # so the HBM writeback is 32 B/row instead of a 512 B padded slab.
        out = jnp.dot(h.astype(jnp.bfloat16), w4_ref[...],
                      preferred_element_type=jnp.float32) + b4_ref[...]
        out_ref[...] = out.astype(out_ref.dtype)

    return scorenet_kernel


def scorenet_forward(x, t, params, *, block_b=None, compute_dtype=None):
    """x: [B, 2], t: [B] -> scores [B, 2] (matches torch ScoreNet.forward)."""
    w1, b1, w2, b2, w3, b3, w4p, b4p = params
    B = x.shape[0]
    if compute_dtype is None:
        compute_dtype = _default_compute_dtype()

    B8 = _round_up(max(B, 1), 8)
    if block_b is None:
        if B8 <= 8:
            block_b = B8
        else:
            # Large tiles amortize per-grid-step overhead; >= 2 steps lets the
            # "parallel" grid axis shard across v7x's two TensorCores.
            block_b = min(2048, _round_up(pl.cdiv(B8, 2), 8))
    B_pad = _round_up(B8, block_b)

    # Single merged activation stream [x0, x1, t, 0]: one DMA per tile instead
    # of two narrow lane-padded blocks.
    x_f = x.astype(jnp.float32)
    t_f = t.astype(jnp.float32).reshape(-1, 1)
    xt = jnp.concatenate([x_f, t_f, jnp.zeros_like(t_f)], axis=-1)   # [B, 4]
    if B_pad != B:
        # Ragged tail only; padded rows (x=0, t=0) stay finite and are sliced off.
        xt = jnp.pad(xt, ((0, B_pad - B), (0, 0)))

    res = lambda shape: pl.BlockSpec(shape, lambda i: (0, 0))  # VMEM-resident

    out = pl.pallas_call(
        _make_kernel(compute_dtype),
        out_shape=jax.ShapeDtypeStruct((B_pad, _OUT_LANES), jnp.float32),
        grid=(B_pad // block_b,),
        in_specs=[
            pl.BlockSpec((block_b, 4), lambda i: (i, 0)),   # merged x/t stream
            res((3, 128)),            # w1 (f32, used on VPU)
            res((1, 128)),            # b1
            res((128, 256)),          # w2 (bf16)
            res((1, 256)),            # b2
            res((256, 128)),          # w3 (bf16)
            res((1, 128)),            # b3
            res((128, _OUT_LANES)),   # w4 padded (bf16)
            res((1, _OUT_LANES)),     # b4 padded
        ],
        out_specs=pl.BlockSpec((block_b, _OUT_LANES), lambda i: (i, 0)),
        compiler_params=pltpu.CompilerParams(
            dimension_semantics=("parallel",),
            vmem_limit_bytes=32 * 1024 * 1024,
        ),
    )(xt, w1, b1, w2, b2, w3, b3, w4p, b4p)

    return out[:B, :2]


def init_params(key):
    # Deterministic init mimicking torch.nn.Linear default
    # (uniform +/- 1/sqrt(fan_in)); weights stored [in, out].
    dims = [(3, 128), (128, 256), (256, 128), (128, 2)]
    raw = []
    for din, dout in dims:
        kw, kb, key = jax.random.split(key, 3)
        bound = 1.0 / (din ** 0.5)
        w = jax.random.uniform(kw, (din, dout), jnp.float32, -bound, bound)
        b = jax.random.uniform(kb, (1, dout), jnp.float32, -bound, bound)
        raw.append((w, b))
    (w1, b1), (w2, b2), (w3, b3), (w4, b4) = raw

    # Head padded only to 8 lanes (narrow output store); MXU weights in bf16.
    w4p = jnp.zeros((128, _OUT_LANES), jnp.float32).at[:, :2].set(w4)
    b4p = jnp.zeros((1, _OUT_LANES), jnp.float32).at[:, :2].set(b4)
    return (w1, b1,
            w2.astype(jnp.bfloat16), b2,
            w3.astype(jnp.bfloat16), b3,
            w4p.astype(jnp.bfloat16), b4p)


def _reference_forward(x, t, params):
    # Pure-JAX f32 reference of the torch module.
    w1, b1, w2, b2, w3, b3, w4p, b4p = params
    t_proj = jnp.log(sigma_min * (sigma_max / sigma_min) ** t)[..., None]
    inp = jnp.concatenate([x, jnp.broadcast_to(t_proj, x[:, :1].shape)], -1)
    silu = lambda h: h * jax.nn.sigmoid(h)
    h = silu(inp @ w1 + b1)
    h = silu(h @ w2.astype(jnp.float32) + b2)
    h = silu(h @ w3.astype(jnp.float32) + b3)
    return (h @ w4p.astype(jnp.float32) + b4p)[:, :2]


def _check(out, ref, tol=0.06):
    denom = float(jnp.maximum(jnp.max(jnp.abs(ref)), 1e-3))
    rel = float(jnp.max(jnp.abs(out - ref))) / denom
    assert rel < tol, f"max normalized error {rel} >= {tol}"


if __name__ == "__main__":
    key = jax.random.PRNGKey(0)
    kx, kt, kp = jax.random.split(key, 3)
    params = init_params(kp)

    # Small shapes consistent with the module (2-D moon points, scalar time).
    B = 8
    x = jax.random.normal(kx, (B, 2), jnp.float32)
    t = jax.random.uniform(kt, (B,), jnp.float32)

    out = scorenet_forward(x, t, params)
    jax.block_until_ready(out)
    assert out.shape == (B, 2) and out.dtype == jnp.float32
    _check(out, _reference_forward(x, t, params))

    # Exercise the multi-step grid + ragged-tail path as well.
    B2 = 200
    kx2, kt2 = jax.random.split(kx)
    x2 = jax.random.normal(kx2, (B2, 2), jnp.float32)
    t2 = jax.random.uniform(kt2, (B2,), jnp.float32)
    out2 = scorenet_forward(x2, t2, params)
    jax.block_until_ready(out2)
    assert out2.shape == (B2, 2)
    _check(out2, _reference_forward(x2, t2, params))

    print("KERNEL_OK")
</pallas_src>

<mosaic_0001>
module attributes {stable_mosaic.version = 11 : i64} {
  func.func @scorenet_kernel(%arg0: i32, %arg1: memref<8x4xf32, #tpu.memory_space<vmem>>, %arg2: memref<3x128xf32, #tpu.memory_space<vmem>>, %arg3: memref<1x128xf32, #tpu.memory_space<vmem>>, %arg4: memref<128x256xbf16, #tpu.memory_space<vmem>>, %arg5: memref<1x256xf32, #tpu.memory_space<vmem>>, %arg6: memref<256x128xbf16, #tpu.memory_space<vmem>>, %arg7: memref<1x128xf32, #tpu.memory_space<vmem>>, %arg8: memref<128x8xbf16, #tpu.memory_space<vmem>>, %arg9: memref<1x8xf32, #tpu.memory_space<vmem>>, %arg10: memref<8x8xf32, #tpu.memory_space<vmem>>) attributes {dimension_semantics = [#tpu.dimension_semantics<parallel>], iteration_bounds = array<i64: 1>, scalar_prefetch = 0 : i64, scratch_operands = 0 : i64, tpu.core_type = #tpu.core_type<tc>, window_params = [{transform_indices = @transform_0, window_bounds = array<i64: 8, 4>}, {pipeline_mode = #tpu.pipeline_mode<synchronous>, transform_indices = @transform_1, window_bounds = array<i64: 3, 128>}, {pipeline_mode = #tpu.pipeline_mode<synchronous>, transform_indices = @transform_2, window_bounds = array<i64: 1, 128>}, {pipeline_mode = #tpu.pipeline_mode<synchronous>, transform_indices = @transform_3, window_bounds = array<i64: 128, 256>}, {pipeline_mode = #tpu.pipeline_mode<synchronous>, transform_indices = @transform_4, window_bounds = array<i64: 1, 256>}, {pipeline_mode = #tpu.pipeline_mode<synchronous>, transform_indices = @transform_5, window_bounds = array<i64: 256, 128>}, {pipeline_mode = #tpu.pipeline_mode<synchronous>, transform_indices = @transform_6, window_bounds = array<i64: 1, 128>}, {pipeline_mode = #tpu.pipeline_mode<synchronous>, transform_indices = @transform_7, window_bounds = array<i64: 128, 8>}, {pipeline_mode = #tpu.pipeline_mode<synchronous>, transform_indices = @transform_8, window_bounds = array<i64: 1, 8>}, {transform_indices = @transform_9, window_bounds = array<i64: 8, 8>}]} {
    %c0 = arith.constant 0 : index
    %c0_0 = arith.constant 0 : index
    %0 = vector.load %arg1[%c0, %c0_0] : memref<8x4xf32, #tpu.memory_space<vmem>>, vector<8x4xf32>
    %1 = vector.extract_strided_slice %0 {offsets = [0, 2], sizes = [8, 1], strides = [1, 1]} : vector<8x4xf32> to vector<8x1xf32>
    %cst = arith.constant 8.51719284 : f32
    %2 = vector.broadcast %cst : f32 to vector<8x1xf32>
    %3 = arith.mulf %1, %2 : vector<8x1xf32>
    %cst_1 = arith.constant -4.60517025 : f32
    %4 = vector.broadcast %cst_1 : f32 to vector<8x1xf32>
    %5 = arith.addf %4, %3 : vector<8x1xf32>
    %c0_2 = arith.constant 0 : index
    %c0_3 = arith.constant 0 : index
    %6 = vector.load %arg2[%c0_2, %c0_3] : memref<3x128xf32, #tpu.memory_space<vmem>>, vector<3x128xf32>
    %7 = vector.extract_strided_slice %0 {offsets = [0, 0], sizes = [8, 1], strides = [1, 1]} : vector<8x4xf32> to vector<8x1xf32>
    %8 = vector.extract_strided_slice %6 {offsets = [0, 0], sizes = [1, 128], strides = [1, 1]} : vector<3x128xf32> to vector<1x128xf32>
    %9 = vector.broadcast %7 : vector<8x1xf32> to vector<8x128xf32>
    %10 = vector.broadcast %8 : vector<1x128xf32> to vector<8x128xf32>
    %11 = arith.mulf %9, %10 : vector<8x128xf32>
    %12 = vector.extract_strided_slice %0 {offsets = [0, 1], sizes = [8, 1], strides = [1, 1]} : vector<8x4xf32> to vector<8x1xf32>
    %13 = vector.extract_strided_slice %6 {offsets = [1, 0], sizes = [1, 128], strides = [1, 1]} : vector<3x128xf32> to vector<1x128xf32>
    %14 = vector.broadcast %12 : vector<8x1xf32> to vector<8x128xf32>
    %15 = vector.broadcast %13 : vector<1x128xf32> to vector<8x128xf32>
    %16 = arith.mulf %14, %15 : vector<8x128xf32>
    %17 = arith.addf %11, %16 : vector<8x128xf32>
    %18 = vector.extract_strided_slice %6 {offsets = [2, 0], sizes = [1, 128], strides = [1, 1]} : vector<3x128xf32> to vector<1x128xf32>
    %19 = vector.broadcast %5 : vector<8x1xf32> to vector<8x128xf32>
    %20 = vector.broadcast %18 : vector<1x128xf32> to vector<8x128xf32>
    %21 = arith.mulf %19, %20 : vector<8x128xf32>
    %22 = arith.addf %17, %21 : vector<8x128xf32>
    %c0_4 = arith.constant 0 : index
    %c0_5 = arith.constant 0 : index
    %23 = vector.load %arg3[%c0_4, %c0_5] : memref<1x128xf32, #tpu.memory_space<vmem>>, vector<1x128xf32>
    %24 = vector.broadcast %23 : vector<1x128xf32> to vector<8x128xf32>
    %25 = arith.addf %22, %24 : vector<8x128xf32>
    %cst_6 = arith.constant 5.000000e-01 : f32
    %26 = vector.broadcast %cst_6 : f32 to vector<8x128xf32>
    %27 = arith.mulf %26, %25 : vector<8x128xf32>
    %28 = math.tanh %27 : vector<8x128xf32>
    %cst_7 = arith.constant 5.000000e-01 : f32
    %29 = vector.broadcast %cst_7 : f32 to vector<8x128xf32>
    %30 = arith.mulf %29, %28 : vector<8x128xf32>
    %cst_8 = arith.constant 5.000000e-01 : f32
    %31 = vector.broadcast %cst_8 : f32 to vector<8x128xf32>
    %32 = arith.addf %30, %31 : vector<8x128xf32>
    %33 = arith.mulf %25, %32 : vector<8x128xf32>
    %34 = arith.truncf %33 : vector<8x128xf32> to vector<8x128xbf16>
    %c0_9 = arith.constant 0 : index
    %c0_10 = arith.constant 0 : index
    %35 = vector.load %arg4[%c0_9, %c0_10] : memref<128x256xbf16, #tpu.memory_space<vmem>>, vector<128x256xbf16>
    %cst_11 = arith.constant dense<0.000000e+00> : vector<8x256xf32>
    %36 = tpu.matmul %34, %35, %cst_11 {dimension_numbers = #tpu.dot_dimension_numbers<[1], [0], [0], [1], [0, 0, 1, 1], [], []>} : vector<8x128xbf16>, vector<128x256xbf16>, vector<8x256xf32> -> vector<8x256xf32>
    %c0_12 = arith.constant 0 : index
    %c0_13 = arith.constant 0 : index
    %37 = vector.load %arg5[%c0_12, %c0_13] : memref<1x256xf32, #tpu.memory_space<vmem>>, vector<1x256xf32>
    %38 = vector.broadcast %37 : vector<1x256xf32> to vector<8x256xf32>
    %39 = arith.addf %36, %38 : vector<8x256xf32>
    %cst_14 = arith.constant 5.000000e-01 : f32
    %40 = vector.broadcast %cst_14 : f32 to vector<8x256xf32>
    %41 = arith.mulf %40, %39 : vector<8x256xf32>
    %42 = math.tanh %41 : vector<8x256xf32>
    %cst_15 = arith.constant 5.000000e-01 : f32
    %43 = vector.broadcast %cst_15 : f32 to vector<8x256xf32>
    %44 = arith.mulf %43, %42 : vector<8x256xf32>
    %cst_16 = arith.constant 5.000000e-01 : f32
    %45 = vector.broadcast %cst_16 : f32 to vector<8x256xf32>
    %46 = arith.addf %44, %45 : vector<8x256xf32>
    %47 = arith.mulf %39, %46 : vector<8x256xf32>
    %48 = arith.truncf %47 : vector<8x256xf32> to vector<8x256xbf16>
    %c0_17 = arith.constant 0 : index
    %c0_18 = arith.constant 0 : index
    %49 = vector.load %arg6[%c0_17, %c0_18] : memref<256x128xbf16, #tpu.memory_space<vmem>>, vector<256x128xbf16>
    %cst_19 = arith.constant dense<0.000000e+00> : vector<8x128xf32>
    %50 = tpu.matmul %48, %49, %cst_19 {dimension_numbers = #tpu.dot_dimension_numbers<[1], [0], [0], [1], [0, 0, 1, 1], [], []>} : vector<8x256xbf16>, vector<256x128xbf16>, vector<8x128xf32> -> vector<8x128xf32>
    %c0_20 = arith.constant 0 : index
    %c0_21 = arith.constant 0 : index
    %51 = vector.load %arg7[%c0_20, %c0_21] : memref<1x128xf32, #tpu.memory_space<vmem>>, vector<1x128xf32>
    %52 = vector.broadcast %51 : vector<1x128xf32> to vector<8x128xf32>
    %53 = arith.addf %50, %52 : vector<8x128xf32>
    %cst_22 = arith.constant 5.000000e-01 : f32
    %54 = vector.broadcast %cst_22 : f32 to vector<8x128xf32>
    %55 = arith.mulf %54, %53 : vector<8x128xf32>
    %56 = math.tanh %55 : vector<8x128xf32>
    %cst_23 = arith.constant 5.000000e-01 : f32
    %57 = vector.broadcast %cst_23 : f32 to vector<8x128xf32>
    %58 = arith.mulf %57, %56 : vector<8x128xf32>
    %cst_24 = arith.constant 5.000000e-01 : f32
    %59 = vector.broadcast %cst_24 : f32 to vector<8x128xf32>
    %60 = arith.addf %58, %59 : vector<8x128xf32>
    %61 = arith.mulf %53, %60 : vector<8x128xf32>
    %62 = arith.truncf %61 : vector<8x128xf32> to vector<8x128xbf16>
    %c0_25 = arith.constant 0 : index
    %c0_26 = arith.constant 0 : index
    %63 = vector.load %arg8[%c0_25, %c0_26] : memref<128x8xbf16, #tpu.memory_space<vmem>>, vector<128x8xbf16>
    %cst_27 = arith.constant dense<0.000000e+00> : vector<8x8xf32>
    %64 = tpu.matmul %62, %63, %cst_27 {dimension_numbers = #tpu.dot_dimension_numbers<[1], [0], [0], [1], [0, 0, 1, 1], [], []>} : vector<8x128xbf16>, vector<128x8xbf16>, vector<8x8xf32> -> vector<8x8xf32>
    %c0_28 = arith.constant 0 : index
    %c0_29 = arith.constant 0 : index
    %65 = vector.load %arg9[%c0_28, %c0_29] : memref<1x8xf32, #tpu.memory_space<vmem>>, vector<1x8xf32>
    %66 = vector.broadcast %65 : vector<1x8xf32> to vector<8x8xf32>
    %67 = arith.addf %64, %66 : vector<8x8xf32>
    %c0_30 = arith.constant 0 : index
    %c0_31 = arith.constant 0 : index
    %68 = vector.load %arg10[%c0_30, %c0_31] : memref<8x8xf32, #tpu.memory_space<vmem>>, vector<8x8xf32>
    tpu.vector_store %arg10[%c0_30, %c0_31], %67 {strides = array<i32>} : memref<8x8xf32, #tpu.memory_space<vmem>>, vector<8x8xf32>,
    return
  }
  func.func @transform_0(%arg0: i32) -> (i32, i32) {
    %c0_i32 = arith.constant 0 : i32
    %c0_i32_0 = arith.constant 0 : i32
    return %arg0, %c0_i32 : i32, i32
  }
  func.func @transform_1(%arg0: i32) -> (i32, i32) {
    %c0_i32 = arith.constant 0 : i32
    %c0_i32_0 = arith.constant 0 : i32
    %c0_i32_1 = arith.constant 0 : i32
    return %c0_i32, %c0_i32_0 : i32, i32
  }
  func.func @transform_2(%arg0: i32) -> (i32, i32) {
    %c0_i32 = arith.constant 0 : i32
    %c0_i32_0 = arith.constant 0 : i32
    %c0_i32_1 = arith.constant 0 : i32
    return %c0_i32, %c0_i32_0 : i32, i32
  }
  func.func @transform_3(%arg0: i32) -> (i32, i32) {
    %c0_i32 = arith.constant 0 : i32
    %c0_i32_0 = arith.constant 0 : i32
    %c0_i32_1 = arith.constant 0 : i32
    return %c0_i32, %c0_i32_0 : i32, i32
  }
  func.func @transform_4(%arg0: i32) -> (i32, i32) {
    %c0_i32 = arith.constant 0 : i32
    %c0_i32_0 = arith.constant 0 : i32
    %c0_i32_1 = arith.constant 0 : i32
    return %c0_i32, %c0_i32_0 : i32, i32
  }
  func.func @transform_5(%arg0: i32) -> (i32, i32) {
    %c0_i32 = arith.constant 0 : i32
    %c0_i32_0 = arith.constant 0 : i32
    %c0_i32_1 = arith.constant 0 : i32
    return %c0_i32, %c0_i32_0 : i32, i32
  }
  func.func @transform_6(%arg0: i32) -> (i32, i32) {
    %c0_i32 = arith.constant 0 : i32
    %c0_i32_0 = arith.constant 0 : i32
    %c0_i32_1 = arith.constant 0 : i32
    return %c0_i32, %c0_i32_0 : i32, i32
  }
  func.func @transform_7(%arg0: i32) -> (i32, i32) {
    %c0_i32 = arith.constant 0 : i32
    %c0_i32_0 = arith.constant 0 : i32
    %c0_i32_1 = arith.constant 0 : i32
    return %c0_i32, %c0_i32_0 : i32, i32
  }
  func.func @transform_8(%arg0: i32) -> (i32, i32) {
    %c0_i32 = arith.constant 0 : i32
    %c0_i32_0 = arith.constant 0 : i32
    %c0_i32_1 = arith.constant 0 : i32
    return %c0_i32, %c0_i32_0 : i32, i32
  }
  func.func @transform_9(%arg0: i32) -> (i32, i32) {
    %c0_i32 = arith.constant 0 : i32
    %c0_i32_0 = arith.constant 0 : i32
    return %arg0, %c0_i32 : i32, i32
  }
}

</mosaic_0001>

<llo_original>
// kernel: tpu_custom_call.1
$region0: #{tpu_custom_call.1}
  #allocation0 [shape = 'u32[]', space=smem, size = 0x4, offset = 0x4, fixed_abs, tag = 'smem constant byte address 0x4 - core index']
  #allocation1 [shape = 'u32[144,128]{1,0:T(1,128)}', space=vmem, size = 0x12000, scoped, tag = 'internal scratch']
  %s0 = inlined_call_operand.vmem [shape: f32[8,4], index: 0, kind: input, shape index: {}]
  %s1 = inlined_call_operand.vmem [shape: f32[3,128], index: 1, kind: input, shape index: {}]
  %s2 = inlined_call_operand.vmem [shape: f32[1,128], index: 2, kind: input, shape index: {}]
  %s3 = inlined_call_operand.hbm [shape: bf16[128,256], index: 3, kind: input, shape index: {}]
  %s4 = inlined_call_operand.vmem [shape: f32[1,256], index: 4, kind: input, shape index: {}]
  %s5 = inlined_call_operand.hbm [shape: bf16[256,128], index: 5, kind: input, shape index: {}]
  %s6 = inlined_call_operand.vmem [shape: f32[1,128], index: 6, kind: input, shape index: {}]
  %s7 = inlined_call_operand.vmem [shape: bf16[128,8], index: 7, kind: input, shape index: {}]
  %s8 = inlined_call_operand.vmem [shape: f32[1,8], index: 8, kind: input, shape index: {}]
  %s9 = inlined_call_operand.hbm [shape: f32[8,8], index: 9, kind: output, shape index: {}]
  %s10 = sld [smem:[#allocation0]]
  $region54: #{tpu_custom_call.1} parent=0
    _
  %s12 = ssub.s32 1, %s10
  %s13 = scalar_select 0, %s12, %s10
  $region1: #{tpu_custom_call.1} parent=0
    #allocation2 [shape = 'u8[65536]{0}', space=vmem, size = 0x10000, scoped, tag = 'input window, operand 3, single buffered']
    #allocation3 [shape = 's32[1]{0}', space=sflag, size = 0x4, scoped, tag = 'scoped memory for tpu_custom_call.1']
    #allocation4 [shape = 's32[1]{0}', space=sflag, size = 0x4, scoped, tag = 'scoped memory for tpu_custom_call.1']
    #allocation5 [shape = 'u8[65536]{0}', space=vmem, size = 0x10000, scoped, tag = 'input window, operand 5, single buffered']
    #allocation6 [shape = 's32[1]{0}', space=sflag, size = 0x4, scoped, tag = 'scoped memory for tpu_custom_call.1']
    #allocation7 [shape = 'u8[4096]{0}', space=vmem, size = 0x1000, scoped, tag = 'output window, operand 0, single buffered']
    %14 = vsyncpa [#allocation3], 0
    %15 = vsyncpa [#allocation6], 0
    %16 = vsyncpa [#allocation4], 0
    // Predicated region
    $region2: #{tpu_custom_call.1} parent=1 // pred_check
      _
    $region3: #{tpu_custom_call.1} parent=1 // pred_check_branch
      %18 = sbr.rel (0) target = $region5
    $region4: #{tpu_custom_call.1} parent=1 // pred_region
      _
    $region5: #{tpu_custom_call.1} parent=1 // pred_fallthru
      _
    // Predicated region
    $region6: #{tpu_custom_call.1} parent=1 // pred_check
      _
    $region7: #{tpu_custom_call.1} parent=1 // pred_check_branch
      %20 = sbr.rel (0) target = $region9
    $region8: #{tpu_custom_call.1} parent=1 // pred_region
      _
    $region9: #{tpu_custom_call.1} parent=1 // pred_fallthru
      _
    // Predicated region
    $region10: #{tpu_custom_call.1} parent=1 // pred_check
      _
    $region11: #{tpu_custom_call.1} parent=1 // pred_check_branch
      %22 = sbr.rel (0) target = $region13
    $region12: #{tpu_custom_call.1} parent=1 // pred_region
      _
    $region13: #{tpu_custom_call.1} parent=1 // pred_fallthru
      _
    // Predicated region
    $region14: #{tpu_custom_call.1} parent=1 // pred_check
      _
    $region15: #{tpu_custom_call.1} parent=1 // pred_check_branch
      %24 = sbr.rel (0) target = $region17
    $region16: #{tpu_custom_call.1} parent=1 // pred_region
      %s26 = ssub.s32 2048, 2048
      %27 = vsyncadd [#allocation3], %s26
      %s28 = sshll.u32 [#allocation2], 4
      %s29 = int_to_ptr.vmem [resolvable:$true] %s28
      %34 = dma.hbm_to_vmem [thread:$0]  %s3, 2048, %s29, [#allocation3], 128, 128, 8
    $region17: #{tpu_custom_call.1} parent=1 // pred_fallthru
      _
    // Predicated region
    $region18: #{tpu_custom_call.1} parent=1 // pred_check
      _
    $region19: #{tpu_custom_call.1} parent=1 // pred_check_branch
      %36 = sbr.rel (0) target = $region21
    $region20: #{tpu_custom_call.1} parent=1 // pred_region
      _
    $region21: #{tpu_custom_call.1} parent=1 // pred_fallthru
      _
    // Predicated region
    $region22: #{tpu_custom_call.1} parent=1 // pred_check
      _
    $region23: #{tpu_custom_call.1} parent=1 // pred_check_branch
      %38 = sbr.rel (0) target = $region25
    $region24: #{tpu_custom_call.1} parent=1 // pred_region
      %s40 = ssub.s32 2048, 2048
      %41 = vsyncadd [#allocation6], %s40
      %s42 = sshll.u32 [#allocation5], 4
      %s43 = int_to_ptr.vmem [resolvable:$true] %s42
      %48 = dma.hbm_to_vmem [thread:$0]  %s5, 2048, %s43, [#allocation6], 64, 64, 4
    $region25: #{tpu_custom_call.1} parent=1 // pred_fallthru
      _
    // Predicated region
    $region26: #{tpu_custom_call.1} parent=1 // pred_check
      _
    $region27: #{tpu_custom_call.1} parent=1 // pred_check_branch
      %50 = sbr.rel (0) target = $region29
    $region28: #{tpu_custom_call.1} parent=1 // pred_region
      _
    $region29: #{tpu_custom_call.1} parent=1 // pred_fallthru
      _
    // Predicated region
    $region30: #{tpu_custom_call.1} parent=1 // pred_check
      _
    $region31: #{tpu_custom_call.1} parent=1 // pred_check_branch
      %52 = sbr.rel (0) target = $region33
    $region32: #{tpu_custom_call.1} parent=1 // pred_region
      _
    $region33: #{tpu_custom_call.1} parent=1 // pred_fallthru
      _
    // Predicated region
    $region34: #{tpu_custom_call.1} parent=1 // pred_check
      _
    $region35: #{tpu_custom_call.1} parent=1 // pred_check_branch
      %54 = sbr.rel (0) target = $region37
    $region36: #{tpu_custom_call.1} parent=1 // pred_region
      _
    $region37: #{tpu_custom_call.1} parent=1 // pred_fallthru
      _
    // Predicated region
    $region38: #{tpu_custom_call.1} parent=1 // pred_check
      _
    $region39: #{tpu_custom_call.1} parent=1 // pred_check_branch
      %56 = sbr.rel (0) target = $region41
    $region40: #{tpu_custom_call.1} parent=1 // pred_region
      %57 = dma.done [#allocation3], 2048
    $region41: #{tpu_custom_call.1} parent=1 // pred_fallthru
      _
    // Predicated region
    $region42: #{tpu_custom_call.1} parent=1 // pred_check
      _
    $region43: #{tpu_custom_call.1} parent=1 // pred_check_branch
      %59 = sbr.rel (0) target = $region45
    $region44: #{tpu_custom_call.1} parent=1 // pred_region
      %60 = dma.done [#allocation6], 2048
    $region45: #{tpu_custom_call.1} parent=1 // pred_fallthru
      _
    %v62 = vld [vmem:[%s0] sm:$0xff]
    %v63 = vmul.f32 %v62, 8.517193
    %v64 = vadd.f32 %v63, -4.6051702
    %v65 = vld [vmem:[%s1] sm:$0x7]
    %67 = vset.pattern.permute.xlu0 0
    %68 = vperm.xlu0 %67, %v62
    %v69 = vpop.permute.xlu0 %68
    %v71 = vlaneseq
    %v72 = vshrl.u32 %v71, 7
    %v73 = vsub.s32 0, %v72
    %v74 = vrot.slane %v65, %v73
    %v75 = vmul.f32 %v69, %v74
    %76 = vset.pattern.permute.xlu0 1
    %77 = vperm.xlu0 %76, %v62
    %v78 = vpop.permute.xlu0 %77
    %v80 = vlaneseq
    %v81 = vshrl.u32 %v80, 7
    %v82 = vsub.s32 1, %v81
    %v83 = vrot.slane %v65, %v82
    %v84 = vmul.f32 %v78, %v83
    %v85 = vadd.f32 %v75, %v84
    %87 = vset.pattern.permute.xlu0 2
    %88 = vperm.xlu0 %87, %v64
    %v89 = vpop.permute.xlu0 %88
    %v91 = vlaneseq
    %v92 = vshrl.u32 %v91, 7
    %v93 = vsub.s32 2, %v92
    %v94 = vrot.slane %v65, %v93
    %v95 = vmul.f32 %v89, %v94
    %v96 = vadd.f32 %v85, %v95
    %v97 = vld [vmem:[%s2] sm:$0x1]
    %v99 = vlaneseq
    %v100 = vshrl.u32 %v99, 7
    %v101 = vsub.s32 0, %v100
    %v102 = vrot.slane %v97, %v101
    %v104 = vadd.f32 %v96, %v102
    %v105 = vmul.f32 %v104, 0.5
    %v106 = vtanh.pop %v105
    %v107 = vmul.f32 %v106, 0.5
    %v108 = vadd.f32 %v107, 0.5
    %v109 = vmul.f32 %v104, %v108
    %v110 = vpack.c.bf16 %v109, %v109
    %v111 = vld [vmem:[#allocation2] sm:$0xff]
    %v112 = vld [vmem:[#allocation2 + $0x8] sm:$0xff]
    %v113 = vld [vmem:[#allocation2 + $0x10] sm:$0xff]
    %v114 = vld [vmem:[#allocation2 + $0x18] sm:$0xff]
    %v115 = vld [vmem:[#allocation2 + $0x20] sm:$0xff]
    %v116 = vld [vmem:[#allocation2 + $0x28] sm:$0xff]
    %v117 = vld [vmem:[#allocation2 + $0x30] sm:$0xff]
    %v118 = vld [vmem:[#allocation2 + $0x38] sm:$0xff]
    %v119 = vld [vmem:[#allocation2 + $0x40] sm:$0xff]
    %v120 = vld [vmem:[#allocation2 + $0x48] sm:$0xff]
    %v121 = vld [vmem:[#allocation2 + $0x50] sm:$0xff]
    %v122 = vld [vmem:[#allocation2 + $0x58] sm:$0xff]
    %v123 = vld [vmem:[#allocation2 + $0x60] sm:$0xff]
    %v124 = vld [vmem:[#allocation2 + $0x68] sm:$0xff]
    %v125 = vld [vmem:[#allocation2 + $0x70] sm:$0xff]
    %v126 = vld [vmem:[#allocation2 + $0x78] sm:$0xff]
    %v127 = vld [vmem:[%s4] sm:$0x3]
    %v129 = vlaneseq
    %v130 = vshrl.u32 %v129, 7
    %v131 = vsub.s32 0, %v130
    %v132 = vrot.slane %v127, %v131
    %v133 = vlaneseq
    %v134 = vshrl.u32 %v133, 7
    %v135 = vsub.s32 1, %v134
    %v136 = vrot.slane %v127, %v135
    %v155 = vunpack.c.l.b16 %v111
    %v156 = vunpack.c.h.b16 %v111
    %v157 = vunpack.c.l.b16 %v112
    %v158 = vunpack.c.h.b16 %v112
    %v159 = vunpack.c.l.b16 %v113
    %v160 = vunpack.c.h.b16 %v113
    %v161 = vunpack.c.l.b16 %v114
    %v162 = vunpack.c.h.b16 %v114
    %v163 = vunpack.c.l.b16 %v115
    %v164 = vunpack.c.h.b16 %v115
    %v165 = vunpack.c.l.b16 %v116
    %v166 = vunpack.c.h.b16 %v116
    %v167 = vunpack.c.l.b16 %v117
    %v168 = vunpack.c.h.b16 %v117
    %v169 = vunpack.c.l.b16 %v118
    %v170 = vunpack.c.h.b16 %v118
    %v171 = vunpack.c.l.b16 %v119
    %v172 = vunpack.c.h.b16 %v119
    %v173 = vunpack.c.l.b16 %v120
    %v174 = vunpack.c.h.b16 %v120
    %v175 = vunpack.c.l.b16 %v121
    %v176 = vunpack.c.h.b16 %v121
    %v177 = vunpack.c.l.b16 %v122
    %v178 = vunpack.c.h.b16 %v122
    %v179 = vunpack.c.l.b16 %v123
    %v180 = vunpack.c.h.b16 %v123
    %v181 = vunpack.c.l.b16 %v124
    %v182 = vunpack.c.h.b16 %v124
    %v183 = vunpack.c.l.b16 %v125
    %v184 = vunpack.c.h.b16 %v125
    %v185 = vunpack.c.l.b16 %v126
    %v186 = vunpack.c.h.b16 %v126
    %v187 = vpack.c.b16 %v157, %v155
    %v188 = vpack.c.b16 %v158, %v156
    %v189 = vpack.c.b16 %v161, %v159
    %v190 = vpack.c.b16 %v162, %v160
    %v191 = vpack.c.b16 %v165, %v163
    %v192 = vpack.c.b16 %v166, %v164
    %v193 = vpack.c.b16 %v169, %v167
    %v194 = vpack.c.b16 %v170, %v168
    %v195 = vpack.c.b16 %v173, %v171
    %v196 = vpack.c.b16 %v174, %v172
    %v197 = vpack.c.b16 %v177, %v175
    %v198 = vpack.c.b16 %v178, %v176
    %v199 = vpack.c.b16 %v181, %v179
    %v200 = vpack.c.b16 %v182, %v180
    %v201 = vpack.c.b16 %v185, %v183
    %v202 = vpack.c.b16 %v186, %v184
    %219 = vmatprep.subr.bf16.mxu0 %v188
    %220 = vmatpush1.bf16.msra.mxu0 %v187
    %221 = vmatprep.subr.bf16.mxu0 %v190
    %222 = vmatpush1.bf16.msra.mxu0 %v189
    %223 = vmatprep.subr.bf16.mxu0 %v192
    %224 = vmatpush1.bf16.msra.mxu0 %v191
    %225 = vmatprep.subr.bf16.mxu0 %v194
    %226 = vmatpush1.bf16.msra.mxu0 %v193
    %227 = vmatprep.subr.bf16.mxu0 %v196
    %228 = vmatpush1.bf16.msra.mxu0 %v195
    %229 = vmatprep.subr.bf16.mxu0 %v198
    %230 = vmatpush1.bf16.msra.mxu0 %v197
    %231 = vmatprep.subr.bf16.mxu0 %v200
    %232 = vmatpush1.bf16.msra.mxu0 %v199
    %233 = vmatprep.subr.bf16.mxu0 %v202
    %234 = vmatpush1.bf16.msra.mxu0 %v201
    %235 = vmatprep.subr.bf16.mxu0 0
    %236 = vmatpush1.bf16.msra.mxu0 0
    %237 = vmatprep.subr.bf16.mxu0 0
    %238 = vmatpush1.bf16.msra.mxu0 0
    %239 = vmatprep.subr.bf16.mxu0 0
    %240 = vmatpush1.bf16.msra.mxu0 0
    %241 = vmatprep.subr.bf16.mxu0 0
    %242 = vmatpush1.bf16.msra.mxu0 0
    %243 = vmatprep.subr.bf16.mxu0 0
    %244 = vmatpush1.bf16.msra.mxu0 0
    %245 = vmatprep.subr.bf16.mxu0 0
    %246 = vmatpush1.bf16.msra.mxu0 0
    %247 = vmatprep.subr.bf16.mxu0 0
    %248 = vmatpush1.bf16.msra.mxu0 0
    %249 = vmatprep.subr.bf16.mxu0 0
    %250 = vmatpush1.bf16.msra.mxu0 0
    %251 = vmatprep.mubr.bf16.mxu0 0
    %252 = vmatmul.mubr.bf16.gmra.mrb[0].mxu0 %v110
    %v253 = vpop.f32.mrb[0].mxu0
    %v254 = vadd.f32 %v132, %v253
    %v255 = vpop.f32.mrb[0].mxu0
    %v256 = vadd.f32 %v136, %v255
    %v257 = vpop.f32.mrb[0].mxu0
    %v258 = vpop.f32.mrb[0].mxu0
    %259 = vdwg.mxu0
    %v260 = vmul.f32 %v254, 0.5
    %v261 = vmul.f32 %v256, 0.5
    %v262 = vtanh.pop %v260
    %v263 = vtanh.pop %v261
    %v264 = vmul.f32 %v262, 0.5
    %v265 = vmul.f32 %v263, 0.5
    %v266 = vadd.f32 %v264, 0.5
    %v267 = vadd.f32 %v265, 0.5
    %v268 = vmul.f32 %v254, %v266
    %v269 = vmul.f32 %v256, %v267
    %v270 = vpack.c.bf16 %v268, %v268
    %v271 = vpack.c.bf16 %v269, %v269
    %v272 = vld [vmem:[#allocation5] sm:$0xf]
    %v273 = vld [vmem:[#allocation5 + $0x4] sm:$0xf]
    %v274 = vld [vmem:[#allocation5 + $0x8] sm:$0xf]
    %v275 = vld [vmem:[#allocation5 + $0xc] sm:$0xf]
    %v276 = vld [vmem:[#allocation5 + $0x10] sm:$0xf]
    %v277 = vld [vmem:[#allocation5 + $0x14] sm:$0xf]
    %v278 = vld [vmem:[#allocation5 + $0x18] sm:$0xf]
    %v279 = vld [vmem:[#allocation5 + $0x1c] sm:$0xf]
    %v280 = vld [vmem:[#allocation5 + $0x20] sm:$0xf]
    %v281 = vld [vmem:[#allocation5 + $0x24] sm:$0xf]
    %v282 = vld [vmem:[#allocation5 + $0x28] sm:$0xf]
    %v283 = vld [vmem:[#allocation5 + $0x2c] sm:$0xf]
    %v284 = vld [vmem:[#allocation5 + $0x30] sm:$0xf]
    %v285 = vld [vmem:[#allocation5 + $0x34] sm:$0xf]
    %v286 = vld [vmem:[#allocation5 + $0x38] sm:$0xf]
    %v287 = vld [vmem:[#allocation5 + $0x3c] sm:$0xf]
    %v288 = vld [vmem:[#allocation5 + $0x40] sm:$0xf]
    %v289 = vld [vmem:[#allocation5 + $0x44] sm:$0xf]
    %v290 = vld [vmem:[#allocation5 + $0x48] sm:$0xf]
    %v291 = vld [vmem:[#allocation5 + $0x4c] sm:$0xf]
    %v292 = vld [vmem:[#allocation5 + $0x50] sm:$0xf]
    %v293 = vld [vmem:[#allocation5 + $0x54] sm:$0xf]
    %v294 = vld [vmem:[#allocation5 + $0x58] sm:$0xf]
    %v295 = vld [vmem:[#allocation5 + $0x5c] sm:$0xf]
    %v296 = vld [vmem:[#allocation5 + $0x60] sm:$0xf]
    %v297 = vld [vmem:[#allocation5 + $0x64] sm:$0xf]
    %v298 = vld [vmem:[#allocation5 + $0x68] sm:$0xf]
    %v299 = vld [vmem:[#allocation5 + $0x6c] sm:$0xf]
    %v300 = vld [vmem:[#allocation5 + $0x70] sm:$0xf]
    %v301 = vld [vmem:[#allocation5 + $0x74] sm:$0xf]
    %v302 = vld [vmem:[#allocation5 + $0x78] sm:$0xf]
    %v303 = vld [vmem:[#allocation5 + $0x7c] sm:$0xf]
    %v304 = vld [vmem:[%s6] sm:$0x1]
    %v306 = vlaneseq
    %v307 = vshrl.u32 %v306, 7
    %v308 = vsub.s32 0, %v307
    %v309 = vrot.slane %v304, %v308
    %v343 = vunpack.c.l.b16 %v272
    %v344 = vunpack.c.l.b16 %v273
    %v345 = vunpack.c.l.b16 %v274
    %v346 = vunpack.c.l.b16 %v275
    %v347 = vunpack.c.l.b16 %v276
    %v348 = vunpack.c.l.b16 %v277
    %v349 = vunpack.c.l.b16 %v278
    %v350 = vunpack.c.l.b16 %v279
    %v351 = vunpack.c.l.b16 %v280
    %v352 = vunpack.c.l.b16 %v281
    %v353 = vunpack.c.l.b16 %v282
    %v354 = vunpack.c.l.b16 %v283
    %v355 = vunpack.c.l.b16 %v284
    %v356 = vunpack.c.l.b16 %v285
    %v357 = vunpack.c.l.b16 %v286
    %v358 = vunpack.c.l.b16 %v287
    %v359 = vunpack.c.l.b16 %v288
    %v360 = vunpack.c.l.b16 %v289
    %v361 = vunpack.c.l.b16 %v290
    %v362 = vunpack.c.l.b16 %v291
    %v363 = vunpack.c.l.b16 %v292
    %v364 = vunpack.c.l.b16 %v293
    %v365 = vunpack.c.l.b16 %v294
    %v366 = vunpack.c.l.b16 %v295
    %v367 = vunpack.c.l.b16 %v296
    %v368 = vunpack.c.l.b16 %v297
    %v369 = vunpack.c.l.b16 %v298
    %v370 = vunpack.c.l.b16 %v299
    %v371 = vunpack.c.l.b16 %v300
    %v372 = vunpack.c.l.b16 %v301
    %v373 = vunpack.c.l.b16 %v302
    %v374 = vunpack.c.l.b16 %v303
    %v375 = vpack.c.b16 %v344, %v343
    %v376 = vpack.c.b16 %v346, %v345
    %v377 = vpack.c.b16 %v348, %v347
    %v378 = vpack.c.b16 %v350, %v349
    %v379 = vpack.c.b16 %v352, %v351
    %v380 = vpack.c.b16 %v354, %v353
    %v381 = vpack.c.b16 %v356, %v355
    %v382 = vpack.c.b16 %v358, %v357
    %v383 = vpack.c.b16 %v360, %v359
    %v384 = vpack.c.b16 %v362, %v361
    %v385 = vpack.c.b16 %v364, %v363
    %v386 = vpack.c.b16 %v366, %v365
    %v387 = vpack.c.b16 %v368, %v367
    %v388 = vpack.c.b16 %v370, %v369
    %v389 = vpack.c.b16 %v372, %v371
    %v390 = vpack.c.b16 %v374, %v373
    %407 = vmatprep.subr.bf16.mxu0 0
    %408 = vmatpush1.bf16.msra.mxu0 %v375
    %409 = vmatprep.subr.bf16.mxu0 0
    %410 = vmatpush1.bf16.msra.mxu0 %v376
    %411 = vmatprep.subr.bf16.mxu0 0
    %412 = vmatpush1.bf16.msra.mxu0 %v377
    %413 = vmatprep.subr.bf16.mxu0 0
    %414 = vmatpush1.bf16.msra.mxu0 %v378
    %415 = vmatprep.subr.bf16.mxu0 0
    %416 = vmatpush1.bf16.msra.mxu0 %v379
    %417 = vmatprep.subr.bf16.mxu0 0
    %418 = vmatpush1.bf16.msra.mxu0 %v380
    %419 = vmatprep.subr.bf16.mxu0 0
    %420 = vmatpush1.bf16.msra.mxu0 %v381
    %421 = vmatprep.subr.bf16.mxu0 0
    %422 = vmatpush1.bf16.msra.mxu0 %v382
    %423 = vmatprep.subr.bf16.mxu0 0
    %424 = vmatpush1.bf16.msra.mxu0 %v383
    %425 = vmatprep.subr.bf16.mxu0 0
    %426 = vmatpush1.bf16.msra.mxu0 %v384
    %427 = vmatprep.subr.bf16.mxu0 0
    %428 = vmatpush1.bf16.msra.mxu0 %v385
    %429 = vmatprep.subr.bf16.mxu0 0
    %430 = vmatpush1.bf16.msra.mxu0 %v386
    %431 = vmatprep.subr.bf16.mxu0 0
    %432 = vmatpush1.bf16.msra.mxu0 %v387
    %433 = vmatprep.subr.bf16.mxu0 0
    %434 = vmatpush1.bf16.msra.mxu0 %v388
    %435 = vmatprep.subr.bf16.mxu0 0
    %436 = vmatpush1.bf16.msra.mxu0 %v389
    %437 = vmatprep.subr.bf16.mxu0 0
    %438 = vmatpush1.bf16.msra.mxu0 %v390
    %439 = vmatprep.mubr.bf16.mxu0 %v271
    %440 = vmatmul.mubr.bf16.gmra.mrb[0].mxu0 %v270
    %v441 = vpop.f32.mrb[0].mxu0
    %v442 = vadd.f32 %v309, %v441
    %v443 = vpop.f32.mrb[0].mxu0
    %v444 = vpop.f32.mrb[0].mxu0
    %v445 = vpop.f32.mrb[0].mxu0
    %446 = vdwg.mxu0
    %v447 = vmul.f32 %v442, 0.5
    %v448 = vtanh.pop %v447
    %v449 = vmul.f32 %v448, 0.5
    %v450 = vadd.f32 %v449, 0.5
    %v451 = vmul.f32 %v442, %v450
    %v452 = vpack.c.bf16 %v451, %v451
    %v453 = vld [vmem:[%s7] sm:$0xf]
    %v454 = vld [vmem:[%s7 + $0x4] sm:$0xf]
    %v455 = vld [vmem:[%s7 + $0x8] sm:$0xf]
    %v456 = vld [vmem:[%s7 + $0xc] sm:$0xf]
    %v457 = vld [vmem:[%s7 + $0x10] sm:$0xf]
    %v458 = vld [vmem:[%s7 + $0x14] sm:$0xf]
    %v459 = vld [vmem:[%s7 + $0x18] sm:$0xf]
    %v460 = vld [vmem:[%s7 + $0x1c] sm:$0xf]
    %v461 = vld [vmem:[%s7 + $0x20] sm:$0xf]
    %v462 = vld [vmem:[%s7 + $0x24] sm:$0xf]
    %v463 = vld [vmem:[%s7 + $0x28] sm:$0xf]
    %v464 = vld [vmem:[%s7 + $0x2c] sm:$0xf]
    %v465 = vld [vmem:[%s7 + $0x30] sm:$0xf]
    %v466 = vld [vmem:[%s7 + $0x34] sm:$0xf]
    %v467 = vld [vmem:[%s7 + $0x38] sm:$0xf]
    %v468 = vld [vmem:[%s7 + $0x3c] sm:$0xf]
    %v469 = vld [vmem:[%s8] sm:$0x1]
    %v471 = vlaneseq
    %v472 = vshrl.u32 %v471, 7
    %v473 = vsub.s32 0, %v472
    %v474 = vrot.slane %v469, %v473
    %v492 = vunpack.c.l.b16 %v453
    %v493 = vunpack.c.l.b16 %v454
    %v494 = vunpack.c.l.b16 %v455
    %v495 = vunpack.c.l.b16 %v456
    %v496 = vunpack.c.l.b16 %v457
    %v497 = vunpack.c.l.b16 %v458
    %v498 = vunpack.c.l.b16 %v459
    %v499 = vunpack.c.l.b16 %v460
    %v500 = vunpack.c.l.b16 %v461
    %v501 = vunpack.c.l.b16 %v462
    %v502 = vunpack.c.l.b16 %v463
    %v503 = vunpack.c.l.b16 %v464
    %v504 = vunpack.c.l.b16 %v465
    %v505 = vunpack.c.l.b16 %v466
    %v506 = vunpack.c.l.b16 %v467
    %v507 = vunpack.c.l.b16 %v468
    %v508 = vpack.c.b16 %v493, %v492
    %v509 = vpack.c.b16 %v495, %v494
    %v510 = vpack.c.b16 %v497, %v496
    %v511 = vpack.c.b16 %v499, %v498
    %v512 = vpack.c.b16 %v501, %v500
    %v513 = vpack.c.b16 %v503, %v502
    %v514 = vpack.c.b16 %v505, %v504
    %v515 = vpack.c.b16 %v507, %v506
    %524 = vmatprep.subr.bf16.mxu0 0
    %525 = vmatpush1.bf16.msra.mxu0 %v508
    %526 = vmatprep.subr.bf16.mxu0 0
    %527 = vmatpush1.bf16.msra.mxu0 %v509
    %528 = vmatprep.subr.bf16.mxu0 0
    %529 = vmatpush1.bf16.msra.mxu0 %v510
    %530 = vmatprep.subr.bf16.mxu0 0
    %531 = vmatpush1.bf16.msra.mxu0 %v511
    %532 = vmatprep.subr.bf16.mxu0 0
    %533 = vmatpush1.bf16.msra.mxu0 %v512
    %534 = vmatprep.subr.bf16.mxu0 0
    %535 = vmatpush1.bf16.msra.mxu0 %v513
    %536 = vmatprep.subr.bf16.mxu0 0
    %537 = vmatpush1.bf16.msra.mxu0 %v514
    %538 = vmatprep.subr.bf16.mxu0 0
    %539 = vmatpush1.bf16.msra.mxu0 %v515
    %540 = vmatprep.subr.bf16.mxu0 0
    %541 = vmatpush1.bf16.msra.mxu0 0
    %542 = vmatprep.subr.bf16.mxu0 0
    %543 = vmatpush1.bf16.msra.mxu0 0
    %544 = vmatprep.subr.bf16.mxu0 0
    %545 = vmatpush1.bf16.msra.mxu0 0
    %546 = vmatprep.subr.bf16.mxu0 0
    %547 = vmatpush1.bf16.msra.mxu0 0
    %548 = vmatprep.subr.bf16.mxu0 0
    %549 = vmatpush1.bf16.msra.mxu0 0
    %550 = vmatprep.subr.bf16.mxu0 0
    %551 = vmatpush1.bf16.msra.mxu0 0
    %552 = vmatprep.subr.bf16.mxu0 0
    %553 = vmatpush1.bf16.msra.mxu0 0
    %554 = vmatprep.subr.bf16.mxu0 0
    %555 = vmatpush1.bf16.msra.mxu0 0
    %556 = vmatprep.mubr.bf16.mxu0 0
    %557 = vmatmul.mubr.bf16.gmra.mrb[0].mxu0 %v452
    %v558 = vpop.f32.mrb[0].mxu0
    %v559 = vadd.f32 %v474, %v558
    %v560 = vpop.f32.mrb[0].mxu0
    %v561 = vpop.f32.mrb[0].mxu0
    %v562 = vpop.f32.mrb[0].mxu0
    %563 = vdwg.mxu0
    %vm564 = vcmask 64512
    %565 = vst.msk [vmem:[#allocation7] sm:$0xff] %vm564, %v559
    // Predicated region
    $region46: #{tpu_custom_call.1} parent=1 // pred_check
      _
    $region47: #{tpu_custom_call.1} parent=1 // pred_check_branch
      %567 = sbr.rel (0) target = $region49
    $region48: #{tpu_custom_call.1} parent=1 // pred_region
      %s569 = ssub.s32 128, 128
      %570 = vsyncadd [#allocation4], %s569
      %s572 = sshll.u32 [#allocation7], 4
      %s573 = int_to_ptr.vmem [resolvable:$true] %s572
      %575 = dma.vmem_to_hbm [thread:$0]  %s573, 128, %s9, [#allocation4]
    $region49: #{tpu_custom_call.1} parent=1 // pred_fallthru
      _
    // Predicated region
    $region50: #{tpu_custom_call.1} parent=1 // pred_check
      _
    $region51: #{tpu_custom_call.1} parent=1 // pred_check_branch
      %577 = sbr.rel (0) target = $region53
    $region52: #{tpu_custom_call.1} parent=1 // pred_region
      %578 = dma.done [#allocation4], 128
    $region53: #{tpu_custom_call.1} parent=1 // pred_fallthru
      _
    %579 = vsyncpa [#allocation3], 1
    %580 = vsyncpa [#allocation6], 1
    %581 = vsyncpa [#allocation4], 1

</llo_original>
